<compile_context>
chip_gen: v5e
topology: v5e:2x2
jax: 0.10.0
libtpu: 0.0.40
codegen_flags: <defaults>
</compile_context>

<pallas_src>
from functools import partial

import numpy as np
import jax
import jax.numpy as jnp
from jax.experimental import pallas as pl
from jax.experimental.pallas import tpu as pltpu

N_QUBITS = 4
N_LAYERS = 1
KERNEL_SIZE = 4
STRIDE = 4

# ----------------------------------------------------------------------------
# Host-side (glue): build the 16x4 observable matrix D from the circuit weights
# ----------------------------------------------------------------------------
_I2 = np.eye(2, dtype=np.complex128)
_X = np.array([[0, 1], [1, 0]], dtype=np.complex128)
_Y = np.array([[0, -1j], [1j, 0]], dtype=np.complex128)
_Z = np.array([[1, 0], [0, -1]], dtype=np.complex128)
_H = np.array([[1, 1], [1, -1]], dtype=np.complex128) / np.sqrt(2.0)
_E0 = np.array([1.0, 0.0], dtype=np.complex128)
_RHO_PLUS = 0.5 * np.ones((2, 2), dtype=np.complex128)


def _rz(t):
    return np.diag([np.exp(-0.5j * t), np.exp(0.5j * t)]).astype(np.complex128)


def _ry(t):
    c, s = np.cos(t / 2.0), np.sin(t / 2.0)
    return np.array([[c, -s], [s, c]], dtype=np.complex128)


def _crz(t):
    return np.diag([1.0, 1.0, np.exp(-0.5j * t), np.exp(0.5j * t)]).astype(np.complex128)


def _embed(gate, wires, n=N_QUBITS):
    """Embed a 2^k x 2^k gate acting on `wires` (wire 0 = most significant bit)."""
    dim = 2 ** n
    k = len(wires)
    full = np.zeros((dim, dim), dtype=np.complex128)
    for col in range(dim):
        bits = [(col >> (n - 1 - w)) & 1 for w in range(n)]
        sub_col = 0
        for w in wires:
            sub_col = (sub_col << 1) | bits[w]
        for sub_row in range(2 ** k):
            amp = gate[sub_row, sub_col]
            if amp == 0:
                continue
            new_bits = list(bits)
            for idx, w in enumerate(wires):
                new_bits[w] = (sub_row >> (k - 1 - idx)) & 1
            row = 0
            for b in new_bits:
                row = (row << 1) | b
            full[row, col] += amp
    return full


def _build_unitary(weights_np):
    """Fixed (parameter-only) part of the circuit: CRZ ring + RY layer."""
    V = np.eye(2 ** N_QUBITS, dtype=np.complex128)
    for l in range(N_LAYERS):
        for i in range(N_QUBITS):
            V = _embed(_crz(weights_np[l, i]), [i, (i + 1) % N_QUBITS]) @ V
        for j in range(N_QUBITS, 2 * N_QUBITS):
            V = _embed(_ry(weights_np[l, j]), [j % N_QUBITS]) @ V
    return V


def build_observable_matrix(weights):
    """D[4*p0 + p1, i] = 0.25 * Tr( V^dag Z_i V * (P_p0 ⊗ P_p1 ⊗ rho_+ ⊗ rho_+) )."""
    # TODO(synk): this fold of the PennyLane QNode is host-side NumPy — it is exact for the
    # forward pass but not jit/grad-traceable; recompute dt whenever the weights change.
    w = np.asarray(weights, dtype=np.float64)
    V = _build_unitary(w)
    paulis = [_I2, _X, _Y, _Z]
    D = np.zeros((16, N_QUBITS), dtype=np.float64)
    for i in range(N_QUBITS):
        Mi = V.conj().T @ _embed(_Z, [i]) @ V
        for p0 in range(4):
            for p1 in range(4):
                O = np.kron(np.kron(np.kron(paulis[p0], paulis[p1]), _RHO_PLUS), _RHO_PLUS)
                D[4 * p0 + p1, i] = 0.25 * np.real(np.trace(Mi @ O))
    return jnp.asarray(D, dtype=jnp.float32)


# ----------------------------------------------------------------------------
# Pallas kernel
#   x_ref : (8, TN) f32 — lane m is a window PAIR: sublanes 0-3 = features of window 2m,
#                         sublanes 4-7 = features of window 2m+1 (fully packed vregs).
#   dt_ref: (4, 16) f32 — D.T, loop-invariant (256 B).
#   o_ref : (8, TN) f32 — sublanes 0-3 = <Z_i> of window 2m, 4-7 = window 2m+1.
# ----------------------------------------------------------------------------
def quanv1d_kernel(x_ref, dt_ref, o_ref):
    x = x_ref[...]                       # (8, TN), windows on lanes
    c = jnp.cos(x)                       # EUP on fully packed 8-sublane, lane-dense vregs
    s = jnp.sin(x)
    dt = dt_ref[...]                     # (4, 16)
    ones = jnp.ones_like(c[0:1, :])      # (1, TN), hoisted

    def expectations(base):
        # Bloch features of the two encoded qubits for this half of the pair.
        c0, c1 = c[base + 0:base + 1, :], c[base + 1:base + 2, :]
        c2, c3 = c[base + 2:base + 3, :], c[base + 3:base + 4, :]
        s0, s1 = s[base + 0:base + 1, :], s[base + 1:base + 2, :]
        s2, s3 = s[base + 2:base + 3, :], s[base + 3:base + 4, :]
        f1 = jnp.concatenate([ones, c2 * c3, s2, -(c2 * s3)], axis=0)      # (4, TN)
        # g[4a+b] = f0[a] * f1[b] (outer product); f0 = [1, c0*c1, s0, -c0*s1].
        # Built as 3 broadcast multiplies + one 4-way sublane concat (no 16-way concat,
        # no single-sublane products).
        g = jnp.concatenate(
            [f1, (c0 * c1) * f1, s0 * f1, (-(c0 * s1)) * f1], axis=0)      # (16, TN)
        # (4,16) x (16,TN) -> (4,TN); tiny for the MXU but far from the bottleneck.
        return jnp.dot(dt, g, preferred_element_type=jnp.float32)

    # One unmasked, lane-dense full-width store of the (8, TN) output block.
    o_ref[...] = jnp.concatenate([expectations(0), expectations(4)], axis=0)


def _round_up(x, m):
    return ((x + m - 1) // m) * m


@partial(jax.jit, static_argnames=("max_tile_n",))
def _quanv1d_apply(X, dt, *, max_tile_n=8192):
    """Jitted pack -> pallas_call -> unpack.  X: (bs, L) f32, dt: (4,16) f32."""
    bs, L = X.shape
    # Matches the PyTorch loop `for i in range(0, X.shape[1] - 4, stride)` exactly
    # (inherited off-by-one: the window starting at L-4 is deliberately skipped).
    W = len(range(0, L - 4, STRIDE))
    N = bs * W                                    # total windows, (batch, window) major
    M_raw = (N + 1) // 2                          # lane columns (window pairs)

    # Tile selection: keep tiles large (per-step overhead ~0.35us; VMEM is not a
    # constraint on any generation), but ensure >= 2 grid steps when possible so the
    # "parallel" axis shards across v7x's two TensorCores.
    TN = min(max_tile_n, _round_up(M_raw, 128))
    if _round_up(M_raw, TN) // TN < 2 and TN > 128:
        TN = _round_up((M_raw + 1) // 2, 128)
    M_pad = _round_up(M_raw, TN)
    grid = M_pad // TN

    # Pack: stride == kernel_size == 4 -> contiguous non-overlapping windows.  Flatten,
    # zero-pad, and fold window pairs onto the sublane axis.  Under jit the slice + pad +
    # reshape + transpose fuse into a single HBM pass producing x8.
    flat = X[:, : W * KERNEL_SIZE].reshape(-1)                    # (4*N,)
    flat = jnp.pad(flat, (0, 8 * M_pad - 4 * N))
    x8 = flat.reshape(M_pad, 8).T                                 # (8, M_pad)

    cost = pl.CostEstimate(
        flops=int(300 * M_pad),                 # feature map + (4,16)x(16,.) dot, per pair
        transcendentals=int(16 * M_pad),        # cos + sin over 8 features per pair
        bytes_accessed=int(2 * 8 * M_pad * 4 + dt.size * 4),
    )

    o8 = pl.pallas_call(
        quanv1d_kernel,
        out_shape=jax.ShapeDtypeStruct((8, M_pad), jnp.float32),
        grid=(grid,),
        in_specs=[
            pl.BlockSpec((8, TN), lambda i: (0, i)),
            pl.BlockSpec((N_QUBITS, 16), lambda i: (0, 0)),   # loop-invariant 256 B
        ],
        out_specs=pl.BlockSpec((8, TN), lambda i: (0, i)),
        compiler_params=pltpu.CompilerParams(dimension_semantics=("parallel",)),
        cost_estimate=cost,
    )(x8, dt)

    # Unpack (fused under jit): (8, M_pad) -> (N, 4) per-window expectations; padded
    # lane columns compute well-defined garbage and are sliced off here, before any
    # downstream use.
    per_window = o8.T.reshape(2 * M_pad, N_QUBITS)[:N]            # (N, 4)
    # torch: cat(dim=1) over windows then .view(-1, 4, 16)
    return per_window.reshape(bs, W * N_QUBITS).reshape(-1, 4, 16)


def quanv1d_forward(X, weights, *, dt=None, max_tile_n=8192):
    """X: (bs, L) float32.  Returns the torch-equivalent .view(-1, 4, 16) output."""
    X = jnp.asarray(X, dtype=jnp.float32)
    assert X.ndim == 2
    bs, L = X.shape
    assert len(range(0, L - 4, STRIDE)) > 0, "input too short for one window"
    if dt is None:
        # Host-side fold of the weights; pass `dt=` explicitly when weights are static
        # across calls to avoid re-folding.
        dt = build_observable_matrix(weights).T                   # (4, 16)
    return _quanv1d_apply(X, dt, max_tile_n=max_tile_n)


# ----------------------------------------------------------------------------
# Pure numpy statevector reference (for correctness check only)
# ----------------------------------------------------------------------------
def reference_forward(X_np, weights_np):
    bs, L = X_np.shape
    starts = list(range(0, L - 4, STRIDE))
    V = _build_unitary(np.asarray(weights_np, dtype=np.float64))
    Zfull = [_embed(_Z, [i]) for i in range(N_QUBITS)]
    plus = _H @ _E0
    rows = []
    for b in range(bs):
        row = []
        for s in starts:
            x = X_np[b, s : s + KERNEL_SIZE]
            psi0 = _ry(x[1]) @ _rz(x[0]) @ _H @ _E0
            psi1 = _ry(x[3]) @ _rz(x[2]) @ _H @ _E0
            phi = np.kron(np.kron(np.kron(psi0, psi1), plus), plus)
            phi = V @ phi
            for i in range(N_QUBITS):
                row.append(np.real(np.vdot(phi, Zfull[i] @ phi)))
        rows.append(row)
    return np.asarray(rows, dtype=np.float64).reshape(-1, 4, 16)


if __name__ == "__main__":
    key = jax.random.PRNGKey(0)
    kx, kw = jax.random.split(key)

    bs, L = 4, 68  # 16 windows of size 4 -> output (bs, 4, 16)
    X = jax.random.normal(kx, (bs, L), dtype=jnp.float32)
    # TorchLayer-style deterministic init: uniform(0, 2*pi), shape (n_layers, 2*n_qubits)
    weights = jax.random.uniform(
        kw, (N_LAYERS, 2 * N_QUBITS), dtype=jnp.float32, minval=0.0, maxval=2.0 * np.pi
    )

    out = quanv1d_forward(X, weights)
    out = jax.block_until_ready(out)
    assert out.shape == (bs, 4, 16), out.shape

    ref = reference_forward(np.asarray(X, dtype=np.float64), np.asarray(weights, dtype=np.float64))
    np.testing.assert_allclose(np.asarray(out), ref, atol=1e-4, rtol=1e-3)

    print("KERNEL_OK")
</pallas_src>

<mosaic_0001>
module attributes {stable_mosaic.version = 11 : i64} {
  func.func @quanv1d_kernel(%arg0: i32, %arg1: memref<8x128xf32, #tpu.memory_space<vmem>>, %arg2: memref<4x16xf32, #tpu.memory_space<vmem>>, %arg3: memref<8x128xf32, #tpu.memory_space<vmem>>) attributes {dimension_semantics = [#tpu.dimension_semantics<parallel>], iteration_bounds = array<i64: 1>, scalar_prefetch = 0 : i64, scratch_operands = 0 : i64, tpu.core_type = #tpu.core_type<tc>, window_params = [{transform_indices = @transform_0, window_bounds = array<i64: 8, 128>}, {pipeline_mode = #tpu.pipeline_mode<synchronous>, transform_indices = @transform_1, window_bounds = array<i64: 4, 16>}, {transform_indices = @transform_2, window_bounds = array<i64: 8, 128>}]} {
    %c0 = arith.constant 0 : index
    %c0_0 = arith.constant 0 : index
    %0 = vector.load %arg1[%c0, %c0_0] : memref<8x128xf32, #tpu.memory_space<vmem>>, vector<8x128xf32>
    %1 = math.cos %0 : vector<8x128xf32>
    %2 = math.sin %0 : vector<8x128xf32>
    %c0_1 = arith.constant 0 : index
    %c0_2 = arith.constant 0 : index
    %3 = vector.load %arg2[%c0_1, %c0_2] : memref<4x16xf32, #tpu.memory_space<vmem>>, vector<4x16xf32>
    %cst = arith.constant 1.000000e+00 : f32
    %4 = vector.broadcast %cst : f32 to vector<1x128xf32>
    %5 = vector.extract_strided_slice %1 {offsets = [0, 0], sizes = [1, 128], strides = [1, 1]} : vector<8x128xf32> to vector<1x128xf32>
    %6 = vector.extract_strided_slice %1 {offsets = [1, 0], sizes = [1, 128], strides = [1, 1]} : vector<8x128xf32> to vector<1x128xf32>
    %7 = vector.extract_strided_slice %1 {offsets = [2, 0], sizes = [1, 128], strides = [1, 1]} : vector<8x128xf32> to vector<1x128xf32>
    %8 = vector.extract_strided_slice %1 {offsets = [3, 0], sizes = [1, 128], strides = [1, 1]} : vector<8x128xf32> to vector<1x128xf32>
    %9 = vector.extract_strided_slice %2 {offsets = [0, 0], sizes = [1, 128], strides = [1, 1]} : vector<8x128xf32> to vector<1x128xf32>
    %10 = vector.extract_strided_slice %2 {offsets = [1, 0], sizes = [1, 128], strides = [1, 1]} : vector<8x128xf32> to vector<1x128xf32>
    %11 = vector.extract_strided_slice %2 {offsets = [2, 0], sizes = [1, 128], strides = [1, 1]} : vector<8x128xf32> to vector<1x128xf32>
    %12 = vector.extract_strided_slice %2 {offsets = [3, 0], sizes = [1, 128], strides = [1, 1]} : vector<8x128xf32> to vector<1x128xf32>
    %13 = arith.mulf %7, %8 : vector<1x128xf32>
    %14 = arith.mulf %7, %12 : vector<1x128xf32>
    %cst_3 = arith.constant 0.000000e+00 : f32
    %15 = vector.broadcast %cst_3 : f32 to vector<1x128xf32>
    %16 = arith.subf %15, %14 : vector<1x128xf32>
    %17 = tpu.concatenate %4, %13, %11, %16 in 0 : vector<1x128xf32>, vector<1x128xf32>, vector<1x128xf32>, vector<1x128xf32> -> vector<4x128xf32>
    %18 = arith.mulf %5, %6 : vector<1x128xf32>
    %19 = vector.broadcast %18 : vector<1x128xf32> to vector<4x128xf32>
    %20 = arith.mulf %19, %17 : vector<4x128xf32>
    %21 = vector.broadcast %9 : vector<1x128xf32> to vector<4x128xf32>
    %22 = arith.mulf %21, %17 : vector<4x128xf32>
    %23 = arith.mulf %5, %10 : vector<1x128xf32>
    %cst_4 = arith.constant 0.000000e+00 : f32
    %24 = vector.broadcast %cst_4 : f32 to vector<1x128xf32>
    %25 = arith.subf %24, %23 : vector<1x128xf32>
    %26 = vector.broadcast %25 : vector<1x128xf32> to vector<4x128xf32>
    %27 = arith.mulf %26, %17 : vector<4x128xf32>
    %28 = tpu.concatenate %17, %20, %22, %27 in 0 : vector<4x128xf32>, vector<4x128xf32>, vector<4x128xf32>, vector<4x128xf32> -> vector<16x128xf32>
    %cst_5 = arith.constant dense<0.000000e+00> : vector<4x128xf32>
    %29 = tpu.matmul %3, %28, %cst_5 {dimension_numbers = #tpu.dot_dimension_numbers<[1], [0], [0], [1], [0, 0, 1, 1], [], []>} : vector<4x16xf32>, vector<16x128xf32>, vector<4x128xf32> -> vector<4x128xf32>
    %30 = vector.extract_strided_slice %1 {offsets = [4, 0], sizes = [1, 128], strides = [1, 1]} : vector<8x128xf32> to vector<1x128xf32>
    %31 = vector.extract_strided_slice %1 {offsets = [5, 0], sizes = [1, 128], strides = [1, 1]} : vector<8x128xf32> to vector<1x128xf32>
    %32 = vector.extract_strided_slice %1 {offsets = [6, 0], sizes = [1, 128], strides = [1, 1]} : vector<8x128xf32> to vector<1x128xf32>
    %33 = vector.extract_strided_slice %1 {offsets = [7, 0], sizes = [1, 128], strides = [1, 1]} : vector<8x128xf32> to vector<1x128xf32>
    %34 = vector.extract_strided_slice %2 {offsets = [4, 0], sizes = [1, 128], strides = [1, 1]} : vector<8x128xf32> to vector<1x128xf32>
    %35 = vector.extract_strided_slice %2 {offsets = [5, 0], sizes = [1, 128], strides = [1, 1]} : vector<8x128xf32> to vector<1x128xf32>
    %36 = vector.extract_strided_slice %2 {offsets = [6, 0], sizes = [1, 128], strides = [1, 1]} : vector<8x128xf32> to vector<1x128xf32>
    %37 = vector.extract_strided_slice %2 {offsets = [7, 0], sizes = [1, 128], strides = [1, 1]} : vector<8x128xf32> to vector<1x128xf32>
    %38 = arith.mulf %32, %33 : vector<1x128xf32>
    %39 = arith.mulf %32, %37 : vector<1x128xf32>
    %cst_6 = arith.constant 0.000000e+00 : f32
    %40 = vector.broadcast %cst_6 : f32 to vector<1x128xf32>
    %41 = arith.subf %40, %39 : vector<1x128xf32>
    %42 = tpu.concatenate %4, %38, %36, %41 in 0 : vector<1x128xf32>, vector<1x128xf32>, vector<1x128xf32>, vector<1x128xf32> -> vector<4x128xf32>
    %43 = arith.mulf %30, %31 : vector<1x128xf32>
    %44 = vector.broadcast %43 : vector<1x128xf32> to vector<4x128xf32>
    %45 = arith.mulf %44, %42 : vector<4x128xf32>
    %46 = vector.broadcast %34 : vector<1x128xf32> to vector<4x128xf32>
    %47 = arith.mulf %46, %42 : vector<4x128xf32>
    %48 = arith.mulf %30, %35 : vector<1x128xf32>
    %cst_7 = arith.constant 0.000000e+00 : f32
    %49 = vector.broadcast %cst_7 : f32 to vector<1x128xf32>
    %50 = arith.subf %49, %48 : vector<1x128xf32>
    %51 = vector.broadcast %50 : vector<1x128xf32> to vector<4x128xf32>
    %52 = arith.mulf %51, %42 : vector<4x128xf32>
    %53 = tpu.concatenate %42, %45, %47, %52 in 0 : vector<4x128xf32>, vector<4x128xf32>, vector<4x128xf32>, vector<4x128xf32> -> vector<16x128xf32>
    %cst_8 = arith.constant dense<0.000000e+00> : vector<4x128xf32>
    %54 = tpu.matmul %3, %53, %cst_8 {dimension_numbers = #tpu.dot_dimension_numbers<[1], [0], [0], [1], [0, 0, 1, 1], [], []>} : vector<4x16xf32>, vector<16x128xf32>, vector<4x128xf32> -> vector<4x128xf32>
    %55 = tpu.concatenate %29, %54 in 0 : vector<4x128xf32>, vector<4x128xf32> -> vector<8x128xf32>
    %c0_9 = arith.constant 0 : index
    %c0_10 = arith.constant 0 : index
    %56 = vector.load %arg3[%c0_9, %c0_10] : memref<8x128xf32, #tpu.memory_space<vmem>>, vector<8x128xf32>
    tpu.vector_store %arg3[%c0_9, %c0_10], %55 {strides = array<i32>} : memref<8x128xf32, #tpu.memory_space<vmem>>, vector<8x128xf32>,
    return
  }
  func.func @transform_0(%arg0: i32) -> (i32, i32) {
    %c0_i32 = arith.constant 0 : i32
    %c0_i32_0 = arith.constant 0 : i32
    return %c0_i32, %arg0 : i32, i32
  }
  func.func @transform_1(%arg0: i32) -> (i32, i32) {
    %c0_i32 = arith.constant 0 : i32
    %c0_i32_0 = arith.constant 0 : i32
    %c0_i32_1 = arith.constant 0 : i32
    return %c0_i32, %c0_i32_0 : i32, i32
  }
  func.func @transform_2(%arg0: i32) -> (i32, i32) {
    %c0_i32 = arith.constant 0 : i32
    %c0_i32_0 = arith.constant 0 : i32
    return %c0_i32, %arg0 : i32, i32
  }
}

</mosaic_0001>

<llo_original>
// kernel: _quanv1d_apply.1
$region0: #{_quanv1d_apply.1}
  #allocation0 [shape = 'u32[]', space=smem, size = 0x4, offset = 0x4, fixed_abs, tag = 'smem constant byte address 0x4 - core index']
  #allocation1 [shape = 'u32[72,128]{1,0:T(1,128)}', space=vmem, size = 0x9000, scoped, tag = 'internal scratch']
  %s0 = inlined_call_operand.vmem [shape: f32[8,128], index: 0, kind: input, shape index: {}]
  %s1 = inlined_call_operand.vmem [shape: f32[4,16], index: 1, kind: input, shape index: {}]
  %s2 = inlined_call_operand.vmem [shape: f32[8,128], index: 2, kind: output, shape index: {}]
  %s3 = sld [smem:[#allocation0]]
  $region18: #{_quanv1d_apply.1} parent=0
    _
  %s5 = ssub.s32 1, %s3
  %s6 = scalar_select 0, %s5, %s3
  // Predicated region
  $region2: #{_quanv1d_apply.1} parent=0 // pred_check
    _
  $region3: #{_quanv1d_apply.1} parent=0 // pred_check_branch
    %8 = sbr.rel (0) target = $region5
  $region4: #{_quanv1d_apply.1} parent=0 // pred_region
    _
  $region5: #{_quanv1d_apply.1} parent=0 // pred_fallthru
    _
  // Predicated region
  $region6: #{_quanv1d_apply.1} parent=0 // pred_check
    _
  $region7: #{_quanv1d_apply.1} parent=0 // pred_check_branch
    %10 = sbr.rel (0) target = $region9
  $region8: #{_quanv1d_apply.1} parent=0 // pred_region
    _
  $region9: #{_quanv1d_apply.1} parent=0 // pred_fallthru
    _
  %v11 = vld [vmem:[%s0] sm:$0xff]
  %v12 = vand.u32 2147483647, %v11
  %vm13 = vcmp.le.f32.partialorder %v12, 0.7853982
  %vm14 = vcmp.lt.s32.totalorder %v11, 0
  %v15 = vand.u32 %v11, 2139095040
  %v16 = vshrl.u32 %v15, 23
  %v17 = vsub.s32 %v16, 127
  %v18 = vand.u32 2147483647, %v11
  %v19 = vand.u32 %v18, 8388607
  %v20 = vor.u32 %v19, 8388608
  %v21 = vsub.s32 0, %v20
  %v22 = vadd.s32 %v17, 1
  %vm23 = vcmp.gt.s32.totalorder %v22, 0
  %v24 = vsel %vm23, %v22, 0
  %v25 = vshrl.u32 %v24, 5
  %v26 = vand.u32 %v24, 31
  %v27 = vsub.s32 32, %v26
  %v28 = vshrl.u32 683565275, %v27
  %v29 = vshll.u32 683565275, %v26
  %v30 = vshrl.u32 2475754826, %v27
  %v31 = vor.u32 %v29, %v30
  %v32 = vshll.u32 2475754826, %v26
  %v33 = vshrl.u32 2131351028, %v27
  %v34 = vor.u32 %v32, %v33
  %v35 = vshll.u32 2131351028, %v26
  %v36 = vshrl.u32 2102212464, %v27
  %v37 = vor.u32 %v35, %v36
  %v38 = vshll.u32 2102212464, %v26
  %v39 = vshrl.u32 920167782, %v27
  %v40 = vor.u32 %v38, %v39
  %v41 = vshll.u32 920167782, %v26
  %v42 = vshrl.u32 1326507024, %v27
  %v43 = vor.u32 %v41, %v42
  %vm44 = vcmp.lt.s32.totalorder %v25, 1
  %vm45 = vcmp.lt.s32.totalorder %v25, 2
  %vm46 = vcmp.lt.s32.totalorder %v25, 3
  %vm47 = vcmp.lt.s32.totalorder %v25, 4
  %v48 = vsel %vm44, %v28, %v31
  %v49 = vsel %vm47, %v37, 2102212464
  %v50 = vsel %vm46, %v34, %v49
  %v51 = vsel %vm45, %v48, %v50
  %v52 = vsel %vm44, %v31, %v34
  %v53 = vsel %vm47, %v40, 920167782
  %v54 = vsel %vm46, %v37, %v53
  %v55 = vsel %vm45, %v52, %v54
  %v56 = vsel %vm44, %v34, %v37
  %v57 = vsel %vm47, %v43, 1326507024
  %v58 = vsel %vm46, %v40, %v57
  %v59 = vsel %vm45, %v56, %v58
  %v60 = vshll.u32 %v20, 8
  %v61 = vand.u32 %v60, 65535
  %v62 = vshrl.u32 %v60, 16
  %v63 = vand.u32 %v59, 65535
  %v64 = vshrl.u32 %v59, 16
  %v65 = vmul.u32 %v61, %v63
  %v66 = vmul.u32 %v61, %v64
  %v67 = vmul.u32 %v62, %v63
  %v68 = vmul.u32 %v62, %v64
  %v69 = vshll.u32 %v66, 16
  %v70 = vshrl.u32 %v66, 16
  %v71 = vshll.u32 %v67, 16
  %v72 = vshrl.u32 %v67, 16
  %vm73 = vc.u32 %v65, %v69
  %v74 = vsel %vm73, 1, 0
  %v75 = vadd.s32 %v65, %v69
  %v76 = vadd.s32 %v68, %v74
  %vm77 = vc.u32 %v75, %v71
  %v78 = vsel %vm77, 1, 0
  %v79 = vadd.s32 %v75, %v71
  %v80 = vadd.s32 %v76, %v78
  %v81 = vadd.s32 %v80, %v70
  %v82 = vadd.s32 %v81, %v72
  %v83 = vand.u32 %v60, 65535
  %v84 = vshrl.u32 %v60, 16
  %v85 = vand.u32 %v55, 65535
  %v86 = vshrl.u32 %v55, 16
  %v87 = vmul.u32 %v83, %v85
  %v88 = vmul.u32 %v83, %v86
  %v89 = vmul.u32 %v84, %v85
  %v90 = vmul.u32 %v84, %v86
  %v91 = vshll.u32 %v88, 16
  %v92 = vshrl.u32 %v88, 16
  %v93 = vshll.u32 %v89, 16
  %v94 = vshrl.u32 %v89, 16
  %vm95 = vc.u32 %v87, %v91
  %v96 = vsel %vm95, 1, 0
  %v97 = vadd.s32 %v87, %v91
  %v98 = vadd.s32 %v90, %v96
  %vm99 = vc.u32 %v97, %v93
  %v100 = vsel %vm99, 1, 0
  %v101 = vadd.s32 %v97, %v93
  %v102 = vadd.s32 %v98, %v100
  %v103 = vadd.s32 %v102, %v92
  %v104 = vadd.s32 %v103, %v94
  %v105 = vmul.u32 %v60, %v51
  %v106 = vadd.s32 %v82, %v101
  %vm107 = vc.u32 %v82, %v101
  %v108 = vadd.s32 %v104, 1
  %v109 = vsel %vm107, %v108, %v104
  %v110 = vadd.s32 %v105, %v109
  %v111 = vadd.s32 %v110, 536870912
  %v112 = vshrl.u32 %v111, 30
  %v113 = vshll.u32 %v112, 30
  %v114 = vsub.s32 %v110, %v113
  %vm115 = vcmp.lt.s32.totalorder %v114, 0
  %v116 = vsub.s32 0, %v114
  %v117 = vsel %vm115, %v116, %v114
  %v118 = vclz %v117
  %v119 = vsub.s32 %v118, 2
  %vm120 = vcmp.gt.s32.totalorder 0, %v119
  %v121 = vsel %vm120, 0, %v119
  %v122 = vsub.s32 32, %v121
  %v123 = vshll.u32 %v114, %v121
  %v124 = vshrl.u32 %v106, %v122
  %v125 = vor.u32 %v123, %v124
  %v126 = vsub.s32 4294967266, %v121
  %v127 = vadd.s32 %v126, 127
  %v128 = vshll.u32 %v127, 23
  %v129 = vor.u32 4788187, %v128
  %v130 = vand.u32 2147483647, %v129
  %v132 = vcvt.s32.f32 %v125
  %v133 = vmul.f32 %v132, %v130
  %v134 = vxor.u32 %v133, 2147483648
  %v135 = vsel %vm14, %v134, %v133
  %v136 = vsub.s32 4, %v112
  %v137 = vsel %vm14, %v136, %v112
  %v138 = vsel %vm13, %v11, %v135
  %v139 = vsel %vm13, 0, %v137
  %v140 = vmul.f32 %v138, %v138
  %v141 = vmul.f32 %v140, -0.001358992
  %v142 = vadd.f32 %v141, 0.041655596
  %v143 = vmul.f32 %v140, %v142
  %v144 = vadd.f32 %v143, -0.4999988
  %v145 = vmul.f32 %v140, %v144
  %v146 = vadd.f32 1.0, %v145
  %v147 = vmul.f32 %v138, %v138
  %v148 = vmul.f32 %v147, -0.00019511016
  %v149 = vadd.f32 %v148, 0.008332121
  %v150 = vmul.f32 %v147, %v149
  %v151 = vadd.f32 %v150, -0.16666654
  %v152 = vmul.f32 %v147, %v151
  %v153 = vadd.f32 %v152, 1.0
  %v154 = vmul.f32 %v153, %v138
  %vm155 = vweird.f32 %v11
  %v156 = vand.u32 %v139, 3
  %vm157 = vcmp.lt.s32.totalorder %v156, 2
  %vm158 = vcmp.eq.s32.totalorder %v156, 0
  %v159 = vxor.u32 %v154, 2147483648
  %v160 = vsel %vm158, %v146, %v159
  %vm161 = vcmp.eq.s32.totalorder %v156, 2
  %v162 = vxor.u32 %v146, 2147483648
  %v163 = vsel %vm161, %v162, %v154
  %v164 = vsel %vm157, %v160, %v163
  %v165 = vsel %vm155, nan, %v164
  %v166 = vand.u32 2147483647, %v11
  %vm167 = vcmp.le.f32.partialorder %v166, 0.7853982
  %vm168 = vcmp.lt.s32.totalorder %v11, 0
  %v169 = vand.u32 %v11, 2139095040
  %v170 = vshrl.u32 %v169, 23
  %v171 = vsub.s32 %v170, 127
  %v172 = vand.u32 2147483647, %v11
  %v173 = vand.u32 %v172, 8388607
  %v174 = vor.u32 %v173, 8388608
  %v175 = vsub.s32 0, %v174
  %v176 = vadd.s32 %v171, 1
  %vm177 = vcmp.gt.s32.totalorder %v176, 0
  %v178 = vsel %vm177, %v176, 0
  %v179 = vshrl.u32 %v178, 5
  %v180 = vand.u32 %v178, 31
  %v181 = vsub.s32 32, %v180
  %v182 = vshrl.u32 683565275, %v181
  %v183 = vshll.u32 683565275, %v180
  %v184 = vshrl.u32 2475754826, %v181
  %v185 = vor.u32 %v183, %v184
  %v186 = vshll.u32 2475754826, %v180
  %v187 = vshrl.u32 2131351028, %v181
  %v188 = vor.u32 %v186, %v187
  %v189 = vshll.u32 2131351028, %v180
  %v190 = vshrl.u32 2102212464, %v181
  %v191 = vor.u32 %v189, %v190
  %v192 = vshll.u32 2102212464, %v180
  %v193 = vshrl.u32 920167782, %v181
  %v194 = vor.u32 %v192, %v193
  %v195 = vshll.u32 920167782, %v180
  %v196 = vshrl.u32 1326507024, %v181
  %v197 = vor.u32 %v195, %v196
  %vm198 = vcmp.lt.s32.totalorder %v179, 1
  %vm199 = vcmp.lt.s32.totalorder %v179, 2
  %vm200 = vcmp.lt.s32.totalorder %v179, 3
  %vm201 = vcmp.lt.s32.totalorder %v179, 4
  %v202 = vsel %vm198, %v182, %v185
  %v203 = vsel %vm201, %v191, 2102212464
  %v204 = vsel %vm200, %v188, %v203
  %v205 = vsel %vm199, %v202, %v204
  %v206 = vsel %vm198, %v185, %v188
  %v207 = vsel %vm201, %v194, 920167782
  %v208 = vsel %vm200, %v191, %v207
  %v209 = vsel %vm199, %v206, %v208
  %v210 = vsel %vm198, %v188, %v191
  %v211 = vsel %vm201, %v197, 1326507024
  %v212 = vsel %vm200, %v194, %v211
  %v213 = vsel %vm199, %v210, %v212
  %v214 = vshll.u32 %v174, 8
  %v215 = vand.u32 %v214, 65535
  %v216 = vshrl.u32 %v214, 16
  %v217 = vand.u32 %v213, 65535
  %v218 = vshrl.u32 %v213, 16
  %v219 = vmul.u32 %v215, %v217
  %v220 = vmul.u32 %v215, %v218
  %v221 = vmul.u32 %v216, %v217
  %v222 = vmul.u32 %v216, %v218
  %v223 = vshll.u32 %v220, 16
  %v224 = vshrl.u32 %v220, 16
  %v225 = vshll.u32 %v221, 16
  %v226 = vshrl.u32 %v221, 16
  %vm227 = vc.u32 %v219, %v223
  %v228 = vsel %vm227, 1, 0
  %v229 = vadd.s32 %v219, %v223
  %v230 = vadd.s32 %v222, %v228
  %vm231 = vc.u32 %v229, %v225
  %v232 = vsel %vm231, 1, 0
  %v233 = vadd.s32 %v229, %v225
  %v234 = vadd.s32 %v230, %v232
  %v235 = vadd.s32 %v234, %v224
  %v236 = vadd.s32 %v235, %v226
  %v237 = vand.u32 %v214, 65535
  %v238 = vshrl.u32 %v214, 16
  %v239 = vand.u32 %v209, 65535
  %v240 = vshrl.u32 %v209, 16
  %v241 = vmul.u32 %v237, %v239
  %v242 = vmul.u32 %v237, %v240
  %v243 = vmul.u32 %v238, %v239
  %v244 = vmul.u32 %v238, %v240
  %v245 = vshll.u32 %v242, 16
  %v246 = vshrl.u32 %v242, 16
  %v247 = vshll.u32 %v243, 16
  %v248 = vshrl.u32 %v243, 16
  %vm249 = vc.u32 %v241, %v245
  %v250 = vsel %vm249, 1, 0
  %v251 = vadd.s32 %v241, %v245
  %v252 = vadd.s32 %v244, %v250
  %vm253 = vc.u32 %v251, %v247
  %v254 = vsel %vm253, 1, 0
  %v255 = vadd.s32 %v251, %v247
  %v256 = vadd.s32 %v252, %v254
  %v257 = vadd.s32 %v256, %v246
  %v258 = vadd.s32 %v257, %v248
  %v259 = vmul.u32 %v214, %v205
  %v260 = vadd.s32 %v236, %v255
  %vm261 = vc.u32 %v236, %v255
  %v262 = vadd.s32 %v258, 1
  %v263 = vsel %vm261, %v262, %v258
  %v264 = vadd.s32 %v259, %v263
  %v265 = vadd.s32 %v264, 536870912
  %v266 = vshrl.u32 %v265, 30
  %v267 = vshll.u32 %v266, 30
  %v268 = vsub.s32 %v264, %v267
  %vm269 = vcmp.lt.s32.totalorder %v268, 0
  %v270 = vsub.s32 0, %v268
  %v271 = vsel %vm269, %v270, %v268
  %v272 = vclz %v271
  %v273 = vsub.s32 %v272, 2
  %vm274 = vcmp.gt.s32.totalorder 0, %v273
  %v275 = vsel %vm274, 0, %v273
  %v276 = vsub.s32 32, %v275
  %v277 = vshll.u32 %v268, %v275
  %v278 = vshrl.u32 %v260, %v276
  %v279 = vor.u32 %v277, %v278
  %v280 = vsub.s32 4294967266, %v275
  %v281 = vadd.s32 %v280, 127
  %v282 = vshll.u32 %v281, 23
  %v283 = vor.u32 4788187, %v282
  %v284 = vand.u32 2147483647, %v283
  %v286 = vcvt.s32.f32 %v279
  %v287 = vmul.f32 %v286, %v284
  %v288 = vxor.u32 %v287, 2147483648
  %v289 = vsel %vm168, %v288, %v287
  %v290 = vsub.s32 4, %v266
  %v291 = vsel %vm168, %v290, %v266
  %v292 = vsel %vm167, %v11, %v289
  %v293 = vsel %vm167, 0, %v291
  %v294 = vmul.f32 %v292, %v292
  %v295 = vmul.f32 %v294, -0.001358992
  %v296 = vadd.f32 %v295, 0.041655596
  %v297 = vmul.f32 %v294, %v296
  %v298 = vadd.f32 %v297, -0.4999988
  %v299 = vmul.f32 %v294, %v298
  %v300 = vadd.f32 1.0, %v299
  %v301 = vmul.f32 %v292, %v292
  %v302 = vmul.f32 %v301, -0.00019511016
  %v303 = vadd.f32 %v302, 0.008332121
  %v304 = vmul.f32 %v301, %v303
  %v305 = vadd.f32 %v304, -0.16666654
  %v306 = vmul.f32 %v301, %v305
  %v307 = vadd.f32 %v306, 1.0
  %v308 = vmul.f32 %v307, %v292
  %vm309 = vweird.f32 %v11
  %v310 = vadd.s32 %v293, 3
  %v311 = vand.u32 %v310, 3
  %vm312 = vcmp.lt.s32.totalorder %v311, 2
  %vm313 = vcmp.eq.s32.totalorder %v311, 0
  %v314 = vxor.u32 %v308, 2147483648
  %v315 = vsel %vm313, %v300, %v314
  %vm316 = vcmp.eq.s32.totalorder %v311, 2
  %v317 = vxor.u32 %v300, 2147483648
  %v318 = vsel %vm316, %v317, %v308
  %v319 = vsel %vm312, %v315, %v318
  %v320 = vsel %vm309, nan, %v319
  %v321 = vld [vmem:[%s1] sm:$0xf]
  %v323 = vrot.slane %v165, 1
  %v325 = vmul.f32 %v165, %v323
  %v327 = vrot.slane %v320, 1
  %v329 = vmul.f32 %v165, %v327
  %v330 = vsub.f32 0.0, %v329
  %v332 = vrot.slane %v325, 1
  %v335 = vrot.slane %v330, 7
  %vm337 = vcmask 1040384
  %v338 = vsel %vm337, 1.0, %v332
  %vm339 = vcmask 1041408
  %v340 = vsel %vm339, %v338, %v320
  %vm341 = vcmask 1042432
  %v342 = vsel %vm341, %v340, %v335
  %v343 = vperm.slane %v325, 0
  %v344 = vmul.f32 %v343, %v342
  %v345 = vperm.slane %v320, 0
  %v346 = vmul.f32 %v345, %v342
  %v347 = vperm.slane %v330, 0
  %v348 = vmul.f32 %v347, %v342
  %v350 = vrot.slane %v344, 4
  %v353 = vrot.slane %v348, 4
  %vm355 = vcmask 1043456
  %v356 = vsel %vm355, %v342, %v350
  %v357 = vsel %vm355, %v346, %v353
  %vm358 = vcmask 130048
  %v360 = vsel %vm358, %v321, 0
  %362 = vmatpush.msra.mxu0 0.0
  %363 = vmatpush.msra.mxu0 0.0
  %364 = vmatpush.msra.mxu0 0.0
  %365 = vmatpush.msra.mxu0 0.0
  %366 = vmatpush.msra.mxu0 0.0
  %367 = vmatpush.msra.mxu0 0.0
  %368 = vmatpush.msra.mxu0 0.0
  %369 = vmatpush.msra.mxu0 0.0
  %370 = vmatpush.msra.mxu0 0.0
  %371 = vmatpush.msra.mxu0 0.0
  %372 = vmatpush.msra.mxu0 0.0
  %373 = vmatpush.msra.mxu0 0.0
  %374 = vmatpush.msra.mxu0 0.0
  %375 = vmatpush.msra.mxu0 0.0
  %376 = vmatpush.msra.mxu0 %v357
  %377 = vmatpush.msra.mxu0 %v356
  %378 = vmatmul.f32.gmra.mxu0 %v360
  %v379 = vpop.f32.mrf.mxu0
  %v380 = vadd.f32 0.0, %v379
  %381 = vdwg.mxu0
  %v382 = vrot.slane %v325, 5
  %v384 = vrot.slane %v320, 4
  %v386 = vrot.slane %v330, 3
  %v388 = vsel %vm337, 1.0, %v382
  %v389 = vsel %vm339, %v388, %v384
  %v390 = vsel %vm341, %v389, %v386
  %v391 = vperm.slane %v325, 4
  %v392 = vmul.f32 %v391, %v390
  %v393 = vperm.slane %v320, 4
  %v394 = vmul.f32 %v393, %v390
  %v395 = vperm.slane %v330, 4
  %v396 = vmul.f32 %v395, %v390
  %v398 = vrot.slane %v392, 4
  %v401 = vrot.slane %v396, 4
  %v403 = vsel %vm355, %v390, %v398
  %v404 = vsel %vm355, %v394, %v401
  %405 = vmatpush.msra.mxu0 0.0
  %406 = vmatpush.msra.mxu0 0.0
  %407 = vmatpush.msra.mxu0 0.0
  %408 = vmatpush.msra.mxu0 0.0
  %409 = vmatpush.msra.mxu0 0.0
  %410 = vmatpush.msra.mxu0 0.0
  %411 = vmatpush.msra.mxu0 0.0
  %412 = vmatpush.msra.mxu0 0.0
  %413 = vmatpush.msra.mxu0 0.0
  %414 = vmatpush.msra.mxu0 0.0
  %415 = vmatpush.msra.mxu0 0.0
  %416 = vmatpush.msra.mxu0 0.0
  %417 = vmatpush.msra.mxu0 0.0
  %418 = vmatpush.msra.mxu0 0.0
  %419 = vmatpush.msra.mxu0 %v404
  %420 = vmatpush.msra.mxu0 %v403
  %421 = vmatmul.f32.gmra.mxu0 %v360
  %v422 = vpop.f32.mrf.mxu0
  %v423 = vadd.f32 0.0, %v422
  %424 = vdwg.mxu0
  %v426 = vrot.slane %v423, 4
  %v428 = vsel %vm355, %v380, %v426
  %429 = vst [vmem:[%s2] sm:$0xff] %v428
  // Predicated region
  $region10: #{_quanv1d_apply.1} parent=0 // pred_check
    _
  $region11: #{_quanv1d_apply.1} parent=0 // pred_check_branch
    %431 = sbr.rel (0) target = $region13
  $region12: #{_quanv1d_apply.1} parent=0 // pred_region
    _
  $region13: #{_quanv1d_apply.1} parent=0 // pred_fallthru
    _
  // Predicated region
  $region14: #{_quanv1d_apply.1} parent=0 // pred_check
    _
  $region15: #{_quanv1d_apply.1} parent=0 // pred_check_branch
    %433 = sbr.rel (0) target = $region17
  $region16: #{_quanv1d_apply.1} parent=0 // pred_region
    _
  $region17: #{_quanv1d_apply.1} parent=0 // pred_fallthru
    _

</llo_original>
